<compile_context>
chip_gen: v7x
topology: tpu7x:2x2x1
jax: 0.10.0
libtpu: 0.0.40
codegen_flags: <defaults>
</compile_context>

<pallas_src>
import math
from functools import partial

import jax
import jax.numpy as jnp
from jax.experimental import pallas as pl
from jax.experimental.pallas import tpu as pltpu

LN_EPS = 1e-5


def _merge_ln_linear_kernel(x_ref, we_ref, wo_ref, bias_ref, o_ref):
    # x_ref:   (tr, 2, W2, 2C) one contiguous tile; axis 1 = h-parity,
    #          w-parity already folded into the channel axis ([dw=0 | dw=1]).
    # we_ref:  (2C, 2Cout) gamma-folded weight rows for the even-h slab ([x0|x2])
    # wo_ref:  (2C, 2Cout) gamma-folded weight rows for the odd-h  slab ([x1|x3])
    # bias_ref:(1, 2Cout) f32, = beta @ W^T
    # o_ref:   (tr*W2, 2Cout)
    tr, _, w2, c2 = x_ref.shape
    rows = tr * w2

    # Flatten in the native input dtype first (cheaper relayout if W2 % 8 != 0),
    # then upcast to f32 for the LayerNorm math.
    a = x_ref[:, 0, :, :].reshape(rows, c2).astype(jnp.float32)   # even-h slab
    b = x_ref[:, 1, :, :].reshape(rows, c2).astype(jnp.float32)   # odd-h slab

    inv_n = 1.0 / (2.0 * c2)                                      # 1 / (4*C)
    s1 = jnp.sum(a, axis=-1, keepdims=True) + jnp.sum(b, axis=-1, keepdims=True)
    s2 = (jnp.sum(a * a, axis=-1, keepdims=True)
          + jnp.sum(b * b, axis=-1, keepdims=True))
    mean = s1 * inv_n
    var = jnp.maximum(s2 * inv_n - mean * mean, 0.0)              # one-pass var
    inv = jax.lax.rsqrt(var + LN_EPS)

    xn_a = (a - mean) * inv
    xn_b = (b - mean) * inv

    # Two partial matmuls replace the 4C concat; operands in the weight's
    # native dtype (bf16 stays bf16 on the MXU), f32 accumulation.
    out = jnp.dot(xn_a.astype(we_ref.dtype), we_ref[...],
                  preferred_element_type=jnp.float32)
    out = out + jnp.dot(xn_b.astype(wo_ref.dtype), wo_ref[...],
                        preferred_element_type=jnp.float32)
    out = out + bias_ref[...]
    o_ref[...] = out.astype(o_ref.dtype)


def patch_merging_2d(x, reduction_weight, ln_gamma, ln_beta,
                     *, vmem_budget_bytes=None):
    """Pallas implementation of PatchMerging2D.forward.

    Args:
      x: (B, H, W, C) channels-last input (same layout as the PyTorch module).
      reduction_weight: (2C, 4C) torch-style Linear weight (out, in), no bias.
      ln_gamma, ln_beta: (4C,) LayerNorm affine parameters.

    Returns:
      (B, H//2, W//2, 2C) array with x.dtype.
    """
    B, H, W, C = x.shape
    H2, W2 = H // 2, W // 2
    C2, C2out = 2 * C, 2 * C

    # SHAPE_FIX crop for odd H/W (no-op slice when already even).
    # TODO(synk): the torch module's odd-shape warning print is not reproduced.
    xe = x[:, :2 * H2, :2 * W2, :]

    # Free reshape: row r = b*H2 + i holds both h-parities of each 2x2 window,
    # with the w-parity folded into the channel axis ([dw=0 | dw=1]).
    xr = xe.reshape(B * H2, 2, W2, C2)
    R = B * H2
    N = R * W2

    # ---- host-side param prep (tiny, constant-folded under jit) --------------
    # Fold LN gamma into the reduction weight, beta into a bias:
    #   out = ((x-mu)*inv) @ (diag(gamma) @ W^T) + beta @ W^T
    g = ln_gamma.astype(jnp.float32)
    bt = ln_beta.astype(jnp.float32)
    wt = jnp.transpose(reduction_weight).astype(jnp.float32)       # (4C, 2Cout)
    wt_f = g[:, None] * wt
    bias = (bt @ wt).reshape(1, C2out)                             # f32 bias
    wdt = reduction_weight.dtype
    # Kernel's natural channel order:
    #   even-h slab = [x0 | x2]  (torch channel blocks [0:C], [2C:3C])
    #   odd-h  slab = [x1 | x3]  (torch channel blocks [C:2C], [3C:4C])
    w_e = jnp.concatenate([wt_f[0:C], wt_f[2 * C:3 * C]], axis=0).astype(wdt)
    w_o = jnp.concatenate([wt_f[C:2 * C], wt_f[3 * C:4 * C]], axis=0).astype(wdt)

    # ---- generation-aware VMEM budgeting --------------------------------------
    try:
        vmem_cap = int(pltpu.get_tpu_info().vmem_capacity_bytes)
    except Exception:
        vmem_cap = 64 * 1024 * 1024
    small_vmem = vmem_cap <= 64 * 1024 * 1024      # v7x-like: 64 MiB/TC, 2 TCs
    if vmem_budget_bytes is None:
        vmem_budget_bytes = (40 if small_vmem else 96) * 1024 * 1024

    in_isz = x.dtype.itemsize
    out_isz = x.dtype.itemsize
    w_isz = reduction_weight.dtype.itemsize
    # double-buffered pipeline bytes per row of R (input tile + output tile)
    pipe_per_r = 2 * (2 * W2 * C2 * in_isz) + 2 * (W2 * C2out * out_isz)
    # in-kernel f32 temporaries: a, b, xn_a, xn_b, matmul-dtype copies, f32 acc
    tmp_per_r = 6 * (W2 * C2 * 4) + 2 * (W2 * C2out * 4)
    per_r = pipe_per_r + tmp_per_r
    # single-buffered invariants (Buffered(1)) + bias + compiler-internal slack
    fixed = 2 * (C2 * C2out * w_isz) + C2out * 4 + (2 << 20)

    # dtype-aware sublane granularity for the output tile row count
    gran = {1: 32, 2: 16}.get(out_isz, 8)
    m8 = gran // math.gcd(W2, gran)     # tr multiple of m8 => tr*W2 % gran == 0

    tr = max(m8, ((max(vmem_budget_bytes - fixed, per_r) // per_r) // m8) * m8)
    if tr >= R:
        tr = R                          # single full-extent block
    steps = pl.cdiv(R, tr)

    # Expose enough grid steps for pipelining / megacore split, but never shrink
    # a step below ~512 matmul rows (MXU fill + per-step overhead amortization).
    min_steps = 4 if small_vmem else 2
    if steps < min_steps:
        tr_alt = max(m8, (pl.cdiv(R, min_steps) // m8) * m8)
        if tr_alt < tr and tr_alt * W2 >= 512:
            tr = tr_alt
            steps = pl.cdiv(R, tr)
    # v7x-like chips: prefer an even step count so both TensorCores get equal work.
    if small_vmem and steps > 1 and steps % 2 == 1:
        tr_alt = tr - m8
        if tr_alt >= m8 and tr_alt * W2 >= 512 and pl.cdiv(R, tr_alt) % 2 == 0:
            tr = tr_alt
            steps = pl.cdiv(R, tr)
    grid = (steps,)

    need = fixed + tr * per_r
    vmem_limit = int(max(32 * 1024 * 1024, need + need // 4))
    vmem_limit = int(min(vmem_limit, vmem_cap - (8 << 20)))
    vmem_limit = max(vmem_limit, 16 * 1024 * 1024)

    inv_buf = dict(pipeline_mode=pl.Buffered(1))   # grid-invariant: single buffer

    out2d = pl.pallas_call(
        _merge_ln_linear_kernel,
        out_shape=jax.ShapeDtypeStruct((N, C2out), x.dtype),
        grid_spec=pltpu.PrefetchScalarGridSpec(
            num_scalar_prefetch=0,
            grid=grid,
            in_specs=[
                # one contiguous DMA per step: both h-parity slabs of tr rows
                pl.BlockSpec((tr, 2, W2, C2), lambda i: (i, 0, 0, 0)),
                pl.BlockSpec((C2, C2out), lambda i: (0, 0), **inv_buf),
                pl.BlockSpec((C2, C2out), lambda i: (0, 0), **inv_buf),
                pl.BlockSpec((1, C2out), lambda i: (0, 0), **inv_buf),
            ],
            out_specs=pl.BlockSpec((tr * W2, C2out), lambda i: (i, 0)),
        ),
        compiler_params=pltpu.CompilerParams(
            # TODO(synk): on v7x verify "parallel" shards the 1-D grid across both
            # TensorCores; if not, switch to an explicit core-split grid axis.
            dimension_semantics=("parallel",),
            vmem_limit_bytes=vmem_limit,
        ),
    )(xr, w_e, w_o, bias)

    return out2d.reshape(B, H2, W2, C2out)


def _reference(x, reduction_weight, ln_gamma, ln_beta):
    """Pure-JAX reference matching the PyTorch forward exactly."""
    B, H, W, C = x.shape
    H2, W2 = H // 2, W // 2
    xe = x[:, :2 * H2, :2 * W2, :]
    x0 = xe[:, 0::2, 0::2, :]
    x1 = xe[:, 1::2, 0::2, :]
    x2 = xe[:, 0::2, 1::2, :]
    x3 = xe[:, 1::2, 1::2, :]
    m = jnp.concatenate([x0, x1, x2, x3], axis=-1).astype(jnp.float32)
    mean = jnp.mean(m, axis=-1, keepdims=True)
    var = jnp.mean((m - mean) ** 2, axis=-1, keepdims=True)
    mn = (m - mean) / jnp.sqrt(var + LN_EPS) * ln_gamma.astype(jnp.float32) \
        + ln_beta.astype(jnp.float32)
    return jnp.einsum("bhwk,ok->bhwo", mn, reduction_weight).astype(x.dtype)


if __name__ == "__main__":
    key = jax.random.PRNGKey(0)
    kx, kw, kg, kb = jax.random.split(key, 4)

    B, H, W, C = 2, 16, 16, 4          # small shapes consistent with the module
    x = jax.random.normal(kx, (B, H, W, C), dtype=jnp.float32)

    # nn.Linear(4C, 2C, bias=False) weight (out, in) and LayerNorm(4C) affine.
    reduction_weight = jax.random.normal(kw, (2 * C, 4 * C), dtype=jnp.float32) * 0.05
    ln_gamma = 1.0 + 0.1 * jax.random.normal(kg, (4 * C,), dtype=jnp.float32)
    ln_beta = 0.1 * jax.random.normal(kb, (4 * C,), dtype=jnp.float32)

    # 1) f32 run with a tiny VMEM budget to force a multi-step grid (exercises
    #    the row tiling / partial-block path).
    merge_tiled = jax.jit(partial(patch_merging_2d,
                                  vmem_budget_bytes=(2 << 20) + (32 << 10)))
    out = jax.block_until_ready(merge_tiled(x, reduction_weight, ln_gamma, ln_beta))
    ref = _reference(x, reduction_weight, ln_gamma, ln_beta)
    assert out.shape == (B, H // 2, W // 2, 2 * C), out.shape
    assert jnp.allclose(out, ref, atol=5e-4, rtol=5e-4), "f32 mismatch vs reference"

    # 2) bf16 run with the default (generation-aware) budget, single-block grid.
    xb = x.astype(jnp.bfloat16)
    wb = reduction_weight.astype(jnp.bfloat16)
    merge = jax.jit(patch_merging_2d)
    out_b = jax.block_until_ready(merge(xb, wb, ln_gamma, ln_beta))
    ref_b = _reference(xb, wb, ln_gamma, ln_beta)
    assert out_b.shape == (B, H // 2, W // 2, 2 * C), out_b.shape
    assert jnp.allclose(out_b.astype(jnp.float32), ref_b.astype(jnp.float32),
                        atol=5e-2, rtol=5e-2), "bf16 mismatch vs reference"

    print("KERNEL_OK")
</pallas_src>

<mosaic_0001>
module attributes {stable_mosaic.version = 11 : i64} {
  func.func @_merge_ln_linear_kernel(%arg0: i32, %arg1: memref<8x2x8x8xf32, #tpu.memory_space<vmem>>, %arg2: memref<8x8xf32, #tpu.memory_space<vmem>>, %arg3: memref<8x8xf32, #tpu.memory_space<vmem>>, %arg4: memref<1x8xf32, #tpu.memory_space<vmem>>, %arg5: memref<64x8xf32, #tpu.memory_space<vmem>>) attributes {dimension_semantics = [#tpu.dimension_semantics<parallel>], iteration_bounds = array<i64: 2>, scalar_prefetch = 0 : i64, scratch_operands = 0 : i64, tpu.core_type = #tpu.core_type<tc>, window_params = [{transform_indices = @transform_0, window_bounds = array<i64: 8, 2, 8, 8>}, {pipeline_mode = #tpu.pipeline_mode<synchronous>, transform_indices = @transform_1, window_bounds = array<i64: 8, 8>}, {pipeline_mode = #tpu.pipeline_mode<synchronous>, transform_indices = @transform_2, window_bounds = array<i64: 8, 8>}, {pipeline_mode = #tpu.pipeline_mode<synchronous>, transform_indices = @transform_3, window_bounds = array<i64: 1, 8>}, {transform_indices = @transform_4, window_bounds = array<i64: 64, 8>}]} {
    %c0 = arith.constant 0 : index
    %c0_0 = arith.constant 0 : index
    %c0_1 = arith.constant 0 : index
    %c0_2 = arith.constant 0 : index
    %0 = vector.load %arg1[%c0, %c0_0, %c0_1, %c0_2] : memref<8x2x8x8xf32, #tpu.memory_space<vmem>>, vector<8x1x8x8xf32>
    %1 = vector.shape_cast %0 : vector<8x1x8x8xf32> to vector<8x8x8xf32>
    %2 = vector.shape_cast %1 : vector<8x8x8xf32> to vector<64x8xf32>
    %c0_3 = arith.constant 0 : index
    %c1 = arith.constant 1 : index
    %c0_4 = arith.constant 0 : index
    %c0_5 = arith.constant 0 : index
    %3 = vector.load %arg1[%c0_3, %c1, %c0_4, %c0_5] : memref<8x2x8x8xf32, #tpu.memory_space<vmem>>, vector<8x1x8x8xf32>
    %4 = vector.shape_cast %3 : vector<8x1x8x8xf32> to vector<8x8x8xf32>
    %5 = vector.shape_cast %4 : vector<8x8x8xf32> to vector<64x8xf32>
    %cst = arith.constant dense<0.000000e+00> : vector<64xf32>
    %6 = vector.multi_reduction <add>, %2, %cst [1] : vector<64x8xf32> to vector<64xf32>
    %7 = vector.shape_cast %6 : vector<64xf32> to vector<64x1xf32>
    %cst_6 = arith.constant dense<0.000000e+00> : vector<64xf32>
    %8 = vector.multi_reduction <add>, %5, %cst_6 [1] : vector<64x8xf32> to vector<64xf32>
    %9 = vector.shape_cast %8 : vector<64xf32> to vector<64x1xf32>
    %10 = arith.addf %7, %9 : vector<64x1xf32>
    %11 = arith.mulf %2, %2 : vector<64x8xf32>
    %cst_7 = arith.constant dense<0.000000e+00> : vector<64xf32>
    %12 = vector.multi_reduction <add>, %11, %cst_7 [1] : vector<64x8xf32> to vector<64xf32>
    %13 = vector.shape_cast %12 : vector<64xf32> to vector<64x1xf32>
    %14 = arith.mulf %5, %5 : vector<64x8xf32>
    %cst_8 = arith.constant dense<0.000000e+00> : vector<64xf32>
    %15 = vector.multi_reduction <add>, %14, %cst_8 [1] : vector<64x8xf32> to vector<64xf32>
    %16 = vector.shape_cast %15 : vector<64xf32> to vector<64x1xf32>
    %17 = arith.addf %13, %16 : vector<64x1xf32>
    %cst_9 = arith.constant 6.250000e-02 : f32
    %18 = vector.broadcast %cst_9 : f32 to vector<64x1xf32>
    %19 = arith.mulf %10, %18 : vector<64x1xf32>
    %cst_10 = arith.constant 6.250000e-02 : f32
    %20 = vector.broadcast %cst_10 : f32 to vector<64x1xf32>
    %21 = arith.mulf %17, %20 : vector<64x1xf32>
    %22 = arith.mulf %19, %19 : vector<64x1xf32>
    %23 = arith.subf %21, %22 : vector<64x1xf32>
    %cst_11 = arith.constant 0.000000e+00 : f32
    %24 = vector.broadcast %cst_11 : f32 to vector<64x1xf32>
    %25 = arith.maximumf %23, %24 : vector<64x1xf32>
    %cst_12 = arith.constant 9.99999974E-6 : f32
    %26 = vector.broadcast %cst_12 : f32 to vector<64x1xf32>
    %27 = arith.addf %25, %26 : vector<64x1xf32>
    %28 = math.rsqrt %27 : vector<64x1xf32>
    %29 = vector.broadcast %19 : vector<64x1xf32> to vector<64x8xf32>
    %30 = arith.subf %2, %29 : vector<64x8xf32>
    %31 = vector.broadcast %28 : vector<64x1xf32> to vector<64x8xf32>
    %32 = arith.mulf %30, %31 : vector<64x8xf32>
    %33 = vector.broadcast %19 : vector<64x1xf32> to vector<64x8xf32>
    %34 = arith.subf %5, %33 : vector<64x8xf32>
    %35 = vector.broadcast %28 : vector<64x1xf32> to vector<64x8xf32>
    %36 = arith.mulf %34, %35 : vector<64x8xf32>
    %c0_13 = arith.constant 0 : index
    %c0_14 = arith.constant 0 : index
    %37 = vector.load %arg2[%c0_13, %c0_14] : memref<8x8xf32, #tpu.memory_space<vmem>>, vector<8x8xf32>
    %cst_15 = arith.constant dense<0.000000e+00> : vector<64x8xf32>
    %38 = tpu.matmul %32, %37, %cst_15 {dimension_numbers = #tpu.dot_dimension_numbers<[1], [0], [0], [1], [0, 0, 1, 1], [], []>} : vector<64x8xf32>, vector<8x8xf32>, vector<64x8xf32> -> vector<64x8xf32>
    %c0_16 = arith.constant 0 : index
    %c0_17 = arith.constant 0 : index
    %39 = vector.load %arg3[%c0_16, %c0_17] : memref<8x8xf32, #tpu.memory_space<vmem>>, vector<8x8xf32>
    %cst_18 = arith.constant dense<0.000000e+00> : vector<64x8xf32>
    %40 = tpu.matmul %36, %39, %cst_18 {dimension_numbers = #tpu.dot_dimension_numbers<[1], [0], [0], [1], [0, 0, 1, 1], [], []>} : vector<64x8xf32>, vector<8x8xf32>, vector<64x8xf32> -> vector<64x8xf32>
    %41 = arith.addf %38, %40 : vector<64x8xf32>
    %c0_19 = arith.constant 0 : index
    %c0_20 = arith.constant 0 : index
    %42 = vector.load %arg4[%c0_19, %c0_20] : memref<1x8xf32, #tpu.memory_space<vmem>>, vector<1x8xf32>
    %43 = vector.broadcast %42 : vector<1x8xf32> to vector<64x8xf32>
    %44 = arith.addf %41, %43 : vector<64x8xf32>
    %c0_21 = arith.constant 0 : index
    %c0_22 = arith.constant 0 : index
    %45 = vector.load %arg5[%c0_21, %c0_22] : memref<64x8xf32, #tpu.memory_space<vmem>>, vector<64x8xf32>
    tpu.vector_store %arg5[%c0_21, %c0_22], %44 {strides = array<i32>} : memref<64x8xf32, #tpu.memory_space<vmem>>, vector<64x8xf32>,
    return
  }
  func.func @transform_0(%arg0: i32) -> (i32, i32, i32, i32) {
    %c0_i32 = arith.constant 0 : i32
    %c0_i32_0 = arith.constant 0 : i32
    %c0_i32_1 = arith.constant 0 : i32
    %c0_i32_2 = arith.constant 0 : i32
    return %arg0, %c0_i32, %c0_i32_0, %c0_i32_1 : i32, i32, i32, i32
  }
  func.func @transform_1(%arg0: i32) -> (i32, i32) {
    %c0_i32 = arith.constant 0 : i32
    %c0_i32_0 = arith.constant 0 : i32
    %c0_i32_1 = arith.constant 0 : i32
    return %c0_i32, %c0_i32_0 : i32, i32
  }
  func.func @transform_2(%arg0: i32) -> (i32, i32) {
    %c0_i32 = arith.constant 0 : i32
    %c0_i32_0 = arith.constant 0 : i32
    %c0_i32_1 = arith.constant 0 : i32
    return %c0_i32, %c0_i32_0 : i32, i32
  }
  func.func @transform_3(%arg0: i32) -> (i32, i32) {
    %c0_i32 = arith.constant 0 : i32
    %c0_i32_0 = arith.constant 0 : i32
    %c0_i32_1 = arith.constant 0 : i32
    return %c0_i32, %c0_i32_0 : i32, i32
  }
  func.func @transform_4(%arg0: i32) -> (i32, i32) {
    %c0_i32 = arith.constant 0 : i32
    %c0_i32_0 = arith.constant 0 : i32
    return %arg0, %c0_i32 : i32, i32
  }
}

</mosaic_0001>

<llo_original>
// kernel: patch_merging_2d.1
$region0: #{patch_merging_2d.1}
  #allocation0 [shape = 'u32[]', space=smem, size = 0x4, offset = 0x4, fixed_abs, tag = 'smem constant byte address 0x4 - core index']
  #allocation1 [shape = 'u32[144,128]{1,0:T(1,128)}', space=vmem, size = 0x12000, scoped, tag = 'internal scratch']
  %s0 = inlined_call_operand.vmem [shape: f32[16,2,8,8], index: 0, kind: input, shape index: {}]
  %s1 = inlined_call_operand.vmem [shape: f32[8,8], index: 1, kind: input, shape index: {}]
  %s2 = inlined_call_operand.vmem [shape: f32[8,8], index: 2, kind: input, shape index: {}]
  %s3 = inlined_call_operand.vmem [shape: f32[1,8], index: 3, kind: input, shape index: {}]
  %s4 = inlined_call_operand.hbm [shape: f32[128,8], index: 4, kind: output, shape index: {}]
  %s5 = sld [smem:[#allocation0]]
  $region49: #{patch_merging_2d.1} parent=0
    _
  %s7 = ssub.s32 1, %s5
  %s8 = scalar_select 0, %s7, %s5
  $region1: #{patch_merging_2d.1} parent=0
    #allocation2 [shape = 'u8[65536]{0}', space=vmem, size = 0x10000, scoped, tag = 'output window, operand 0']
    #allocation3 [shape = 's32[2]{0}', space=sflag, size = 0x8, scoped, tag = 'scoped memory for patch_merging_2d.1']
    %9 = vsyncpa [#allocation3], 0
    %s10 = scalar_lea.sflag [#allocation3], 1
    %11 = vsyncpa %s10, 0
    loop: start=0, step=1, limit=4
    $region2: #{patch_merging_2d.1} parent=1 // loop_pre_header
      _
    $region3: #{patch_merging_2d.1} parent=1 // loop_header
      %s13 = sphi 0, %s17
      %p14 = scmp.ge.s32.totalorder %s13, 4
      %s23 = sphi 0, %s25
      %s26 = sphi 0, %s23
      %s27 = sphi 0, %s26
      %s43 = sphi 0, %s27
      %s47 = sphi 0, %s47
      %s49 = sphi 0, %s47
      %s50 = sphi 0, %s49
      %s64 = sphi 0, %s50
      %s68 = sphi 0, %s68
      %s70 = sphi 0, %s68
      %s71 = sphi 0, %s70
      %s85 = sphi 0, %s71
      %s89 = sphi 0, %s89
      %s91 = sphi 0, %s89
      %s92 = sphi 0, %s91
      %s106 = sphi 0, %s92
      %s112 = sphi 0, %s114
      %s115 = sphi 0, %s112
      %s116 = sphi 0, %s115
      %s132 = sphi 0, %s116
    $region4: #{patch_merging_2d.1} parent=1 // loop_header_branch
      %16 = sbr.rel (%p14) target = $region8
    $region5: #{patch_merging_2d.1} parent=1 // loop_body
      %s18 = ssub.s32 %s13, 1
      %s19 = ssub.s32 %s13, 2
      %s20 = sadd.s32 %s13, 1
      %s21 = ssub.s32 %s13, %s20
      %p22 = scmp.eq.s32.totalorder %s21, 0
      %s24 = sadd.s32 %s23, 1
      %s25 = scalar_select %p22, %s23, %s24
      %p28 = pneg %p22
      %p29 = scmp.eq.s32.totalorder %s13, 1
      %p30 = por %p28, %p29
      %p31 = scmp.ne.s32.totalorder %s23, %s26
      %p32 = scmp.eq.s32.totalorder %s13, 0
      %p33 = por %p31, %p32
      %p34 = scmp.ne.s32.totalorder %s23, %s26
      %p35 = scmp.eq.s32.totalorder %s18, 1
      %p36 = por %p34, %p35
      %p37 = scmp.ne.s32.totalorder %s26, %s27
      %p38 = scmp.eq.s32.totalorder %s18, 0
      %p39 = por %p37, %p38
      %p40 = scmp.ne.s32.totalorder %s26, %s27
      %p41 = scmp.eq.s32.totalorder %s19, 1
      %p42 = por %p40, %p41
      %p44 = scmp.ne.s32.totalorder %s27, %s43
      %p45 = scmp.eq.s32.totalorder %s19, 0
      %p46 = por %p44, %p45
      %s48 = sadd.s32 %s47, 1
      %p51 = scmp.eq.s32.totalorder %s13, 1
      %p52 = scmp.ne.s32.totalorder %s47, %s49
      %p53 = scmp.eq.s32.totalorder %s13, 0
      %p54 = por %p52, %p53
      %p55 = scmp.ne.s32.totalorder %s47, %s49
      %p56 = scmp.eq.s32.totalorder %s18, 1
      %p57 = por %p55, %p56
      %p58 = scmp.ne.s32.totalorder %s49, %s50
      %p59 = scmp.eq.s32.totalorder %s18, 0
      %p60 = por %p58, %p59
      %p61 = scmp.ne.s32.totalorder %s49, %s50
      %p62 = scmp.eq.s32.totalorder %s19, 1
      %p63 = por %p61, %p62
      %p65 = scmp.ne.s32.totalorder %s50, %s64
      %p66 = scmp.eq.s32.totalorder %s19, 0
      %p67 = por %p65, %p66
      %s69 = sadd.s32 %s68, 1
      %p72 = scmp.eq.s32.totalorder %s13, 1
      %p73 = scmp.ne.s32.totalorder %s68, %s70
      %p74 = scmp.eq.s32.totalorder %s13, 0
      %p75 = por %p73, %p74
      %p76 = scmp.ne.s32.totalorder %s68, %s70
      %p77 = scmp.eq.s32.totalorder %s18, 1
      %p78 = por %p76, %p77
      %p79 = scmp.ne.s32.totalorder %s70, %s71
      %p80 = scmp.eq.s32.totalorder %s18, 0
      %p81 = por %p79, %p80
      %p82 = scmp.ne.s32.totalorder %s70, %s71
      %p83 = scmp.eq.s32.totalorder %s19, 1
      %p84 = por %p82, %p83
      %p86 = scmp.ne.s32.totalorder %s71, %s85
      %p87 = scmp.eq.s32.totalorder %s19, 0
      %p88 = por %p86, %p87
      %s90 = sadd.s32 %s89, 1
      %p93 = scmp.eq.s32.totalorder %s13, 1
      %p94 = scmp.ne.s32.totalorder %s89, %s91
      %p95 = scmp.eq.s32.totalorder %s13, 0
      %p96 = por %p94, %p95
      %p97 = scmp.ne.s32.totalorder %s89, %s91
      %p98 = scmp.eq.s32.totalorder %s18, 1
      %p99 = por %p97, %p98
      %p100 = scmp.ne.s32.totalorder %s91, %s92
      %p101 = scmp.eq.s32.totalorder %s18, 0
      %p102 = por %p100, %p101
      %p103 = scmp.ne.s32.totalorder %s91, %s92
      %p104 = scmp.eq.s32.totalorder %s19, 1
      %p105 = por %p103, %p104
      %p107 = scmp.ne.s32.totalorder %s92, %s106
      %p108 = scmp.eq.s32.totalorder %s19, 0
      %p109 = por %p107, %p108
      %s110 = ssub.s32 %s13, %s20
      %p111 = scmp.eq.s32.totalorder %s110, 0
      %s113 = sadd.s32 %s112, 1
      %s114 = scalar_select %p111, %s112, %s113
      %p117 = pneg %p111
      %p118 = scmp.eq.s32.totalorder %s13, 1
      %p119 = por %p117, %p118
      %p120 = scmp.ne.s32.totalorder %s112, %s115
      %p121 = scmp.eq.s32.totalorder %s13, 0
      %p122 = por %p120, %p121
      %p123 = scmp.ne.s32.totalorder %s112, %s115
      %p124 = scmp.eq.s32.totalorder %s18, 1
      %p125 = por %p123, %p124
      %p126 = scmp.ne.s32.totalorder %s115, %s116
      %p127 = scmp.eq.s32.totalorder %s18, 0
      %p128 = por %p126, %p127
      %p129 = scmp.ne.s32.totalorder %s115, %s116
      %p130 = scmp.eq.s32.totalorder %s19, 1
      %p131 = por %p129, %p130
      %p133 = scmp.ne.s32.totalorder %s116, %s132
      %p134 = scmp.eq.s32.totalorder %s19, 0
      %p135 = por %p133, %p134
      %p136 = scmp.le.s32.totalorder 1, %s13
      %p137 = scmp.lt.s32.totalorder %s13, 3
      %p138 = pnand %p136, %p137
      %p139 = pneg %p138
      // Predicated region
      $region9: #{patch_merging_2d.1} parent=5 // pred_check
        _
      $region10: #{patch_merging_2d.1} parent=5 // pred_check_branch
        %141 = sbr.rel (%p138) target = $region12
      $region11: #{patch_merging_2d.1} parent=5 // pred_region
        %s142 = ssub.s32 %s13, 1
        // Predicated region
        $region13: #{patch_merging_2d.1} parent=11 // pred_check
          %p143 = pneg %p60
        $region14: #{patch_merging_2d.1} parent=11 // pred_check_branch
          %145 = sbr.rel (%p143) target = $region16
        $region15: #{patch_merging_2d.1} parent=11 // pred_region
          _
        $region16: #{patch_merging_2d.1} parent=11 // pred_fallthru
          _
        // Predicated region
        $region17: #{patch_merging_2d.1} parent=11 // pred_check
          %p146 = pneg %p81
        $region18: #{patch_merging_2d.1} parent=11 // pred_check_branch
          %148 = sbr.rel (%p146) target = $region20
        $region19: #{patch_merging_2d.1} parent=11 // pred_region
          _
        $region20: #{patch_merging_2d.1} parent=11 // pred_fallthru
          _
        // Predicated region
        $region21: #{patch_merging_2d.1} parent=11 // pred_check
          %p149 = pneg %p102
        $region22: #{patch_merging_2d.1} parent=11 // pred_check_branch
          %151 = sbr.rel (%p149) target = $region24
        $region23: #{patch_merging_2d.1} parent=11 // pred_region
          _
        $region24: #{patch_merging_2d.1} parent=11 // pred_fallthru
          _
      $region12: #{patch_merging_2d.1} parent=5 // pred_fallthru
        _
      %p152 = scmp.lt.s32.totalorder %s13, 2
      // Predicated region
      $region25: #{patch_merging_2d.1} parent=5 // pred_check
        %p153 = pneg %p152
      $region26: #{patch_merging_2d.1} parent=5 // pred_check_branch
        %155 = sbr.rel (%p153) target = $region28
      $region27: #{patch_merging_2d.1} parent=5 // pred_region
        // Predicated region
        $region29: #{patch_merging_2d.1} parent=27 // pred_check
          %p156 = pneg %p33
        $region30: #{patch_merging_2d.1} parent=27 // pred_check_branch
          %158 = sbr.rel (%p156) target = $region32
        $region31: #{patch_merging_2d.1} parent=27 // pred_region
          %s159 = smul.u32 8, %s13
          %p160 = scmp.lt.s32.totalorder %s159, 15
          %s161 = scalar_select %p160, %s159, 15
          %s162 = smul.addr %s161, 2
          %s163 = smul.addr %s162, 8
          %s164 = scalar_lea.vmem %s0, %s163
          %s165 = smul.u32 8, %s13
        $region32: #{patch_merging_2d.1} parent=27 // pred_fallthru
          _
      $region28: #{patch_merging_2d.1} parent=5 // pred_fallthru
        _
      %p166 = scmp.le.s32.totalorder 1, %s13
      %p167 = scmp.lt.s32.totalorder %s13, 3
      %p168 = pnand %p166, %p167
      %p169 = pneg %p168
      // Predicated region
      $region33: #{patch_merging_2d.1} parent=5 // pred_check
        _
      $region34: #{patch_merging_2d.1} parent=5 // pred_check_branch
        %171 = sbr.rel (%p168) target = $region36
      $region35: #{patch_merging_2d.1} parent=5 // pred_region
        %s172 = ssub.s32 %s13, 1
        %s173 = smul.u32 8, %s18
        %p174 = scmp.lt.s32.totalorder %s173, 15
        %s175 = scalar_select %p174, %s173, 15
        %s176 = smul.addr %s175, 2
        %s177 = smul.addr %s176, 8
        %s178 = scalar_lea.vmem %s0, %s177
        %p179 = pneg %p39
        %p180 = pneg %p36
        %p181 = pneg %p60
        %p182 = pneg %p57
        %p183 = pneg %p81
        %p184 = pneg %p78
        %p185 = pneg %p102
        %p186 = pneg %p99
        %p187 = pneg %p128
        %p188 = pneg %p125
        %s189 = sand.u32 %s115, 1
        %s190 = scalar_lea.sflag [#allocation3], %s189
        %s191 = sand.u32 %s115, 1
        %s192 = smul.addr %s191, 64
        %s193 = scalar_lea.vmem [#allocation2], %s192
        %s194 = smul.u32 8, %s18
        %p195 = scmp.lt.s32.totalorder %s194, 15
        %s196 = scalar_select %p195, %s194, 15
        %s197 = smul.addr %s196, 2
        %s198 = smul.addr %s197, 8
        %s199 = scalar_lea.vmem %s0, %s198
        %s200 = smul.u32 8, %s18
        %s201 = smul.u32 8, %s18
        %v202 = vld [vmem:[%s199] sm:$0xff]
        %v203 = vld [vmem:[%s199 + $0x10] sm:$0xff]
        %v204 = vld [vmem:[%s199 + $0x20] sm:$0xff]
        %v205 = vld [vmem:[%s199 + $0x30] sm:$0xff]
        %v206 = vld [vmem:[%s199 + $0x40] sm:$0xff]
        %v207 = vld [vmem:[%s199 + $0x50] sm:$0xff]
        %v208 = vld [vmem:[%s199 + $0x60] sm:$0xff]
        %v209 = vld [vmem:[%s199 + $0x70] sm:$0xff]
        %s210 = scalar_lea.vmem %s199, 8
        %v211 = vld [vmem:[%s210] sm:$0xff]
        %v212 = vld [vmem:[%s210 + $0x10] sm:$0xff]
        %v213 = vld [vmem:[%s210 + $0x20] sm:$0xff]
        %v214 = vld [vmem:[%s210 + $0x30] sm:$0xff]
        %v215 = vld [vmem:[%s210 + $0x40] sm:$0xff]
        %v216 = vld [vmem:[%s210 + $0x50] sm:$0xff]
        %v217 = vld [vmem:[%s210 + $0x60] sm:$0xff]
        %v218 = vld [vmem:[%s210 + $0x70] sm:$0xff]
        %vm219 = vcmask 64512
        %v220 = vsel %vm219, %v202, 0.0
        %221 = vadd.xlane.f32.xlu0 %v220
        %v222 = vpop.xlane.xlu0 %221
        %v223 = vsel %vm219, %v203, 0.0
        %224 = vadd.xlane.f32.xlu0 %v223
        %v225 = vpop.xlane.xlu0 %224
        %v226 = vsel %vm219, %v204, 0.0
        %227 = vadd.xlane.f32.xlu0 %v226
        %v228 = vpop.xlane.xlu0 %227
        %v229 = vsel %vm219, %v205, 0.0
        %230 = vadd.xlane.f32.xlu0 %v229
        %v231 = vpop.xlane.xlu0 %230
        %v232 = vsel %vm219, %v206, 0.0
        %233 = vadd.xlane.f32.xlu0 %v232
        %v234 = vpop.xlane.xlu0 %233
        %v235 = vsel %vm219, %v207, 0.0
        %236 = vadd.xlane.f32.xlu0 %v235
        %v237 = vpop.xlane.xlu0 %236
        %v238 = vsel %vm219, %v208, 0.0
        %239 = vadd.xlane.f32.xlu0 %v238
        %v240 = vpop.xlane.xlu0 %239
        %v241 = vsel %vm219, %v209, 0.0
        %242 = vadd.xlane.f32.xlu0 %v241
        %v243 = vpop.xlane.xlu0 %242
        %v244 = vsel %vm219, %v211, 0.0
        %245 = vadd.xlane.f32.xlu0 %v244
        %v246 = vpop.xlane.xlu0 %245
        %v247 = vsel %vm219, %v212, 0.0
        %248 = vadd.xlane.f32.xlu0 %v247
        %v249 = vpop.xlane.xlu0 %248
        %v250 = vsel %vm219, %v213, 0.0
        %251 = vadd.xlane.f32.xlu0 %v250
        %v252 = vpop.xlane.xlu0 %251
        %v253 = vsel %vm219, %v214, 0.0
        %254 = vadd.xlane.f32.xlu0 %v253
        %v255 = vpop.xlane.xlu0 %254
        %v256 = vsel %vm219, %v215, 0.0
        %257 = vadd.xlane.f32.xlu0 %v256
        %v258 = vpop.xlane.xlu0 %257
        %v259 = vsel %vm219, %v216, 0.0
        %260 = vadd.xlane.f32.xlu0 %v259
        %v261 = vpop.xlane.xlu0 %260
        %v262 = vsel %vm219, %v217, 0.0
        %263 = vadd.xlane.f32.xlu0 %v262
        %v264 = vpop.xlane.xlu0 %263
        %v265 = vsel %vm219, %v218, 0.0
        %266 = vadd.xlane.f32.xlu0 %v265
        %v267 = vpop.xlane.xlu0 %266
        %v268 = vadd.f32 %v222, %v246
        %v269 = vadd.f32 %v225, %v249
        %v270 = vadd.f32 %v228, %v252
        %v271 = vadd.f32 %v231, %v255
        %v272 = vadd.f32 %v234, %v258
        %v273 = vadd.f32 %v237, %v261
        %v274 = vadd.f32 %v240, %v264
        %v275 = vadd.f32 %v243, %v267
        %v276 = vmul.f32 %v202, %v202
        %v277 = vmul.f32 %v203, %v203
        %v278 = vmul.f32 %v204, %v204
        %v279 = vmul.f32 %v205, %v205
        %v280 = vmul.f32 %v206, %v206
        %v281 = vmul.f32 %v207, %v207
        %v282 = vmul.f32 %v208, %v208
        %v283 = vmul.f32 %v209, %v209
        %v284 = vsel %vm219, %v276, 0.0
        %285 = vadd.xlane.f32.xlu0 %v284
        %v286 = vpop.xlane.xlu0 %285
        %v287 = vsel %vm219, %v277, 0.0
        %288 = vadd.xlane.f32.xlu0 %v287
        %v289 = vpop.xlane.xlu0 %288
        %v290 = vsel %vm219, %v278, 0.0
        %291 = vadd.xlane.f32.xlu0 %v290
        %v292 = vpop.xlane.xlu0 %291
        %v293 = vsel %vm219, %v279, 0.0
        %294 = vadd.xlane.f32.xlu0 %v293
        %v295 = vpop.xlane.xlu0 %294
        %v296 = vsel %vm219, %v280, 0.0
        %297 = vadd.xlane.f32.xlu0 %v296
        %v298 = vpop.xlane.xlu0 %297
        %v299 = vsel %vm219, %v281, 0.0
        %300 = vadd.xlane.f32.xlu0 %v299
        %v301 = vpop.xlane.xlu0 %300
        %v302 = vsel %vm219, %v282, 0.0
        %303 = vadd.xlane.f32.xlu0 %v302
        %v304 = vpop.xlane.xlu0 %303
        %v305 = vsel %vm219, %v283, 0.0
        %306 = vadd.xlane.f32.xlu0 %v305
        %v307 = vpop.xlane.xlu0 %306
        %v308 = vmul.f32 %v211, %v211
        %v309 = vmul.f32 %v212, %v212
        %v310 = vmul.f32 %v213, %v213
        %v311 = vmul.f32 %v214, %v214
        %v312 = vmul.f32 %v215, %v215
        %v313 = vmul.f32 %v216, %v216
        %v314 = vmul.f32 %v217, %v217
        %v315 = vmul.f32 %v218, %v218
        %v316 = vsel %vm219, %v308, 0.0
        %317 = vadd.xlane.f32.xlu0 %v316
        %v318 = vpop.xlane.xlu0 %317
        %v319 = vsel %vm219, %v309, 0.0
        %320 = vadd.xlane.f32.xlu0 %v319
        %v321 = vpop.xlane.xlu0 %320
        %v322 = vsel %vm219, %v310, 0.0
        %323 = vadd.xlane.f32.xlu0 %v322
        %v324 = vpop.xlane.xlu0 %323
        %v325 = vsel %vm219, %v311, 0.0
        %326 = vadd.xlane.f32.xlu0 %v325
        %v327 = vpop.xlane.xlu0 %326
        %v328 = vsel %vm219, %v312, 0.0
        %329 = vadd.xlane.f32.xlu0 %v328
        %v330 = vpop.xlane.xlu0 %329
        %v331 = vsel %vm219, %v313, 0.0
        %332 = vadd.xlane.f32.xlu0 %v331
        %v333 = vpop.xlane.xlu0 %332
        %v334 = vsel %vm219, %v314, 0.0
        %335 = vadd.xlane.f32.xlu0 %v334
        %v336 = vpop.xlane.xlu0 %335
        %v337 = vsel %vm219, %v315, 0.0
        %338 = vadd.xlane.f32.xlu0 %v337
        %v339 = vpop.xlane.xlu0 %338
        %v340 = vadd.f32 %v286, %v318
        %v341 = vadd.f32 %v289, %v321
        %v342 = vadd.f32 %v292, %v324
        %v343 = vadd.f32 %v295, %v327
        %v344 = vadd.f32 %v298, %v330
        %v345 = vadd.f32 %v301, %v333
        %v346 = vadd.f32 %v304, %v336
        %v347 = vadd.f32 %v307, %v339
        %v348 = vmul.f32 %v268, 0.0625
        %v349 = vmul.f32 %v269, 0.0625
        %v350 = vmul.f32 %v270, 0.0625
        %v351 = vmul.f32 %v271, 0.0625
        %v352 = vmul.f32 %v272, 0.0625
        %v353 = vmul.f32 %v273, 0.0625
        %v354 = vmul.f32 %v274, 0.0625
        %v355 = vmul.f32 %v275, 0.0625
        %v356 = vmul.f32 %v340, 0.0625
        %v357 = vmul.f32 %v341, 0.0625
        %v358 = vmul.f32 %v342, 0.0625
        %v359 = vmul.f32 %v343, 0.0625
        %v360 = vmul.f32 %v344, 0.0625
        %v361 = vmul.f32 %v345, 0.0625
        %v362 = vmul.f32 %v346, 0.0625
        %v363 = vmul.f32 %v347, 0.0625
        %v364 = vmul.f32 %v348, %v348
        %v365 = vmul.f32 %v349, %v349
        %v366 = vmul.f32 %v350, %v350
        %v367 = vmul.f32 %v351, %v351
        %v368 = vmul.f32 %v352, %v352
        %v369 = vmul.f32 %v353, %v353
        %v370 = vmul.f32 %v354, %v354
        %v371 = vmul.f32 %v355, %v355
        %v372 = vsub.f32 %v356, %v364
        %v373 = vsub.f32 %v357, %v365
        %v374 = vsub.f32 %v358, %v366
        %v375 = vsub.f32 %v359, %v367
        %v376 = vsub.f32 %v360, %v368
        %v377 = vsub.f32 %v361, %v369
        %v378 = vsub.f32 %v362, %v370
        %v379 = vsub.f32 %v363, %v371
        %v380 = vmax.f32 %v372, 0.0
        %v381 = vmax.f32 %v373, 0.0
        %v382 = vmax.f32 %v374, 0.0
        %v383 = vmax.f32 %v375, 0.0
        %v384 = vmax.f32 %v376, 0.0
        %v385 = vmax.f32 %v377, 0.0
        %v386 = vmax.f32 %v378, 0.0
        %v387 = vmax.f32 %v379, 0.0
        %v388 = vadd.f32 %v380, 1e-05
        %v389 = vadd.f32 %v381, 1e-05
        %v390 = vadd.f32 %v382, 1e-05
        %v391 = vadd.f32 %v383, 1e-05
        %v392 = vadd.f32 %v384, 1e-05
        %v393 = vadd.f32 %v385, 1e-05
        %v394 = vadd.f32 %v386, 1e-05
        %v395 = vadd.f32 %v387, 1e-05
        %v396 = vrsqrt.pop %v388
        %v397 = vrsqrt.pop %v389
        %v398 = vrsqrt.pop %v390
        %v399 = vrsqrt.pop %v391
        %v400 = vrsqrt.pop %v392
        %v401 = vrsqrt.pop %v393
        %v402 = vrsqrt.pop %v394
        %v403 = vrsqrt.pop %v395
        %v404 = vsub.f32 %v202, %v348
        %v405 = vsub.f32 %v203, %v349
        %v406 = vsub.f32 %v204, %v350
        %v407 = vsub.f32 %v205, %v351
        %v408 = vsub.f32 %v206, %v352
        %v409 = vsub.f32 %v207, %v353
        %v410 = vsub.f32 %v208, %v354
        %v411 = vsub.f32 %v209, %v355
        %v412 = vmul.f32 %v404, %v396
        %v413 = vmul.f32 %v405, %v397
        %v414 = vmul.f32 %v406, %v398
        %v415 = vmul.f32 %v407, %v399
        %v416 = vmul.f32 %v408, %v400
        %v417 = vmul.f32 %v409, %v401
        %v418 = vmul.f32 %v410, %v402
        %v419 = vmul.f32 %v411, %v403
        %v420 = vsub.f32 %v211, %v348
        %v421 = vsub.f32 %v212, %v349
        %v422 = vsub.f32 %v213, %v350
        %v423 = vsub.f32 %v214, %v351
        %v424 = vsub.f32 %v215, %v352
        %v425 = vsub.f32 %v216, %v353
        %v426 = vsub.f32 %v217, %v354
        %v427 = vsub.f32 %v218, %v355
        %v428 = vmul.f32 %v420, %v396
        %v429 = vmul.f32 %v421, %v397
        %v430 = vmul.f32 %v422, %v398
        %v431 = vmul.f32 %v423, %v399
        %v432 = vmul.f32 %v424, %v400
        %v433 = vmul.f32 %v425, %v401
        %v434 = vmul.f32 %v426, %v402
        %v435 = vmul.f32 %v427, %v403
        %v436 = vld [vmem:[%s1] sm:$0xff]
        %v437 = vld [vmem:[%s2] sm:$0xff]
        %v439 = vsel %vm219, %v428, 0
        %v442 = vsel %vm219, %v429, 0
        %v445 = vsel %vm219, %v430, 0
        %v448 = vsel %vm219, %v431, 0
        %v451 = vsel %vm219, %v432, 0
        %v454 = vsel %vm219, %v433, 0
        %v457 = vsel %vm219, %v434, 0
        %v460 = vsel %vm219, %v435, 0
        %462 = vmatprep.subr.mxu0 0.0
        %463 = vmatpush1.msra.mxu0 %v437
        %464 = vmatprep.subr.mxu0 0.0
        %465 = vmatpush1.msra.mxu0 0.0
        %466 = vmatprep.subr.mxu0 0.0
        %467 = vmatpush1.msra.mxu0 0.0
        %468 = vmatprep.subr.mxu0 0.0
        %469 = vmatpush1.msra.mxu0 0.0
        %470 = vmatprep.subr.mxu0 0.0
        %471 = vmatpush1.msra.mxu0 0.0
        %472 = vmatprep.subr.mxu0 0.0
        %473 = vmatpush1.msra.mxu0 0.0
        %474 = vmatprep.subr.mxu0 0.0
        %475 = vmatpush1.msra.mxu0 0.0
        %476 = vmatprep.subr.mxu0 0.0
        %477 = vmatpush1.msra.mxu0 0.0
        %478 = vmatprep.subr.mxu0 0.0
        %479 = vmatpush1.msra.mxu0 0.0
        %480 = vmatprep.subr.mxu0 0.0
        %481 = vmatpush1.msra.mxu0 0.0
        %482 = vmatprep.subr.mxu0 0.0
        %483 = vmatpush1.msra.mxu0 0.0
        %484 = vmatprep.subr.mxu0 0.0
        %485 = vmatpush1.msra.mxu0 0.0
        %486 = vmatprep.subr.mxu0 0.0
        %487 = vmatpush1.msra.mxu0 0.0
        %488 = vmatprep.subr.mxu0 0.0
        %489 = vmatpush1.msra.mxu0 0.0
        %490 = vmatprep.subr.mxu0 0.0
        %491 = vmatpush1.msra.mxu0 0.0
        %492 = vmatprep.subr.mxu0 0.0
        %493 = vmatpush1.msra.mxu0 0.0
        %494 = vmatprep.subr.mxu0 0.0
        %495 = vmatpush1.msra.mxu0 0.0
        %496 = vmatprep.subr.mxu0 0.0
        %497 = vmatpush1.msra.mxu0 0.0
        %498 = vmatprep.subr.mxu0 0.0
        %499 = vmatpush1.msra.mxu0 0.0
        %500 = vmatprep.subr.mxu0 0.0
        %501 = vmatpush1.msra.mxu0 0.0
        %502 = vmatprep.subr.mxu0 0.0
        %503 = vmatpush1.msra.mxu0 0.0
        %504 = vmatprep.subr.mxu0 0.0
        %505 = vmatpush1.msra.mxu0 0.0
        %506 = vmatprep.subr.mxu0 0.0
        %507 = vmatpush1.msra.mxu0 0.0
        %508 = vmatprep.subr.mxu0 0.0
        %509 = vmatpush1.msra.mxu0 0.0
        %510 = vmatprep.subr.mxu0 0.0
        %511 = vmatpush1.msra.mxu0 0.0
        %512 = vmatprep.subr.mxu0 0.0
        %513 = vmatpush1.msra.mxu0 0.0
        %514 = vmatprep.subr.mxu0 0.0
        %515 = vmatpush1.msra.mxu0 0.0
        %516 = vmatprep.subr.mxu0 0.0
        %517 = vmatpush1.msra.mxu0 0.0
        %518 = vmatprep.subr.mxu0 0.0
        %519 = vmatpush1.msra.mxu0 0.0
        %520 = vmatprep.subr.mxu0 0.0
        %521 = vmatpush1.msra.mxu0 0.0
        %522 = vmatprep.subr.mxu0 0.0
        %523 = vmatpush1.msra.mxu0 0.0
        %524 = vmatprep.subr.mxu0 0.0
        %525 = vmatpush1.msra.mxu0 0.0
        %526 = vmatprep.mubr.f32.mxu0 0.0
        %527 = vmatmul.mubr.f32.gmra.mrb[0].mxu0 %v439
        %v528 = vpop.f32.mrb[0].mxu0
        %v529 = vadd.f32 0.0, %v528
        %v530 = vpop.f32.mrb[0].mxu0
        %531 = vmatprep.mubr.f32.mxu0 0.0
        %532 = vmatmul.mubr.f32.gmra.mrb[0].mxu0 %v442
        %v533 = vpop.f32.mrb[0].mxu0
        %v534 = vadd.f32 0.0, %v533
        %v535 = vpop.f32.mrb[0].mxu0
        %536 = vmatprep.mubr.f32.mxu0 0.0
        %537 = vmatmul.mubr.f32.gmra.mrb[0].mxu0 %v445
        %v538 = vpop.f32.mrb[0].mxu0
        %v539 = vadd.f32 0.0, %v538
        %v540 = vpop.f32.mrb[0].mxu0
        %541 = vmatprep.mubr.f32.mxu0 0.0
        %542 = vmatmul.mubr.f32.gmra.mrb[0].mxu0 %v448
        %v543 = vpop.f32.mrb[0].mxu0
        %v544 = vadd.f32 0.0, %v543
        %v545 = vpop.f32.mrb[0].mxu0
        %546 = vmatprep.mubr.f32.mxu0 0.0
        %547 = vmatmul.mubr.f32.gmra.mrb[0].mxu0 %v451
        %v548 = vpop.f32.mrb[0].mxu0
        %v549 = vadd.f32 0.0, %v548
        %v550 = vpop.f32.mrb[0].mxu0
        %551 = vmatprep.mubr.f32.mxu0 0.0
        %552 = vmatmul.mubr.f32.gmra.mrb[0].mxu0 %v454
        %v553 = vpop.f32.mrb[0].mxu0
        %v554 = vadd.f32 0.0, %v553
        %v555 = vpop.f32.mrb[0].mxu0
        %556 = vmatprep.mubr.f32.mxu0 0.0
        %557 = vmatmul.mubr.f32.gmra.mrb[0].mxu0 %v457
        %v558 = vpop.f32.mrb[0].mxu0
        %v559 = vadd.f32 0.0, %v558
        %v560 = vpop.f32.mrb[0].mxu0
        %561 = vmatprep.mubr.f32.mxu0 0.0
        %562 = vmatmul.mubr.f32.gmra.mrb[0].mxu0 %v460
        %v563 = vpop.f32.mrb[0].mxu0
        %v564 = vadd.f32 0.0, %v563
        %v565 = vpop.f32.mrb[0].mxu0
        %566 = vdwg.mxu0
        %v568 = vsel %vm219, %v412, 0
        %v571 = vsel %vm219, %v413, 0
        %v574 = vsel %vm219, %v414, 0
        %v577 = vsel %vm219, %v415, 0
        %v580 = vsel %vm219, %v416, 0
        %v583 = vsel %vm219, %v417, 0
        %v586 = vsel %vm219, %v418, 0
        %v589 = vsel %vm219, %v419, 0
        %591 = vmatprep.subr.mxu0 0.0
        %592 = vmatpush1.msra.mxu0 %v436
        %593 = vmatprep.subr.mxu0 0.0
        %594 = vmatpush1.msra.mxu0 0.0
        %595 = vmatprep.subr.mxu0 0.0
        %596 = vmatpush1.msra.mxu0 0.0
        %597 = vmatprep.subr.mxu0 0.0
        %598 = vmatpush1.msra.mxu0 0.0
        %599 = vmatprep.subr.mxu0 0.0
        %600 = vmatpush1.msra.mxu0 0.0
        %601 = vmatprep.subr.mxu0 0.0
        %602 = vmatpush1.msra.mxu0 0.0
        %603 = vmatprep.subr.mxu0 0.0
        %604 = vmatpush1.msra.mxu0 0.0
        %605 = vmatprep.subr.mxu0 0.0
        %606 = vmatpush1.msra.mxu0 0.0
        %607 = vmatprep.subr.mxu0 0.0
        %608 = vmatpush1.msra.mxu0 0.0
        %609 = vmatprep.subr.mxu0 0.0
        %610 = vmatpush1.msra.mxu0 0.0
        %611 = vmatprep.subr.mxu0 0.0
        %612 = vmatpush1.msra.mxu0 0.0
        %613 = vmatprep.subr.mxu0 0.0
        %614 = vmatpush1.msra.mxu0 0.0
        %615 = vmatprep.subr.mxu0 0.0
        %616 = vmatpush1.msra.mxu0 0.0
        %617 = vmatprep.subr.mxu0 0.0
        %618 = vmatpush1.msra.mxu0 0.0
        %619 = vmatprep.subr.mxu0 0.0
        %620 = vmatpush1.msra.mxu0 0.0
        %621 = vmatprep.subr.mxu0 0.0
        %622 = vmatpush1.msra.mxu0 0.0
        %623 = vmatprep.subr.mxu0 0.0
        %624 = vmatpush1.msra.mxu0 0.0
        %625 = vmatprep.subr.mxu0 0.0
        %626 = vmatpush1.msra.mxu0 0.0
        %627 = vmatprep.subr.mxu0 0.0
        %628 = vmatpush1.msra.mxu0 0.0
        %629 = vmatprep.subr.mxu0 0.0
        %630 = vmatpush1.msra.mxu0 0.0
        %631 = vmatprep.subr.mxu0 0.0
        %632 = vmatpush1.msra.mxu0 0.0
        %633 = vmatprep.subr.mxu0 0.0
        %634 = vmatpush1.msra.mxu0 0.0
        %635 = vmatprep.subr.mxu0 0.0
        %636 = vmatpush1.msra.mxu0 0.0
        %637 = vmatprep.subr.mxu0 0.0
        %638 = vmatpush1.msra.mxu0 0.0
        %639 = vmatprep.subr.mxu0 0.0
        %640 = vmatpush1.msra.mxu0 0.0
        %641 = vmatprep.subr.mxu0 0.0
        %642 = vmatpush1.msra.mxu0 0.0
        %643 = vmatprep.subr.mxu0 0.0
        %644 = vmatpush1.msra.mxu0 0.0
        %645 = vmatprep.subr.mxu0 0.0
        %646 = vmatpush1.msra.mxu0 0.0
        %647 = vmatprep.subr.mxu0 0.0
        %648 = vmatpush1.msra.mxu0 0.0
        %649 = vmatprep.subr.mxu0 0.0
        %650 = vmatpush1.msra.mxu0 0.0
        %651 = vmatprep.subr.mxu0 0.0
        %652 = vmatpush1.msra.mxu0 0.0
        %653 = vmatprep.subr.mxu0 0.0
        %654 = vmatpush1.msra.mxu0 0.0
        %655 = vmatprep.mubr.f32.mxu0 0.0
        %656 = vmatmul.mubr.f32.gmra.mrb[0].mxu0 %v568
        %v657 = vpop.f32.mrb[0].mxu0
        %v658 = vadd.f32 %v529, %v657
        %v659 = vpop.f32.mrb[0].mxu0
        %660 = vmatprep.mubr.f32.mxu0 0.0
        %661 = vmatmul.mubr.f32.gmra.mrb[0].mxu0 %v571
        %v662 = vpop.f32.mrb[0].mxu0
        %v663 = vadd.f32 %v534, %v662
        %v664 = vpop.f32.mrb[0].mxu0
        %665 = vmatprep.mubr.f32.mxu0 0.0
        %666 = vmatmul.mubr.f32.gmra.mrb[0].mxu0 %v574
        %v667 = vpop.f32.mrb[0].mxu0
        %v668 = vadd.f32 %v539, %v667
        %v669 = vpop.f32.mrb[0].mxu0
        %670 = vmatprep.mubr.f32.mxu0 0.0
        %671 = vmatmul.mubr.f32.gmra.mrb[0].mxu0 %v577
        %v672 = vpop.f32.mrb[0].mxu0
        %v673 = vadd.f32 %v544, %v672
        %v674 = vpop.f32.mrb[0].mxu0
        %675 = vmatprep.mubr.f32.mxu0 0.0
        %676 = vmatmul.mubr.f32.gmra.mrb[0].mxu0 %v580
        %v677 = vpop.f32.mrb[0].mxu0
        %v678 = vadd.f32 %v549, %v677
        %v679 = vpop.f32.mrb[0].mxu0
        %680 = vmatprep.mubr.f32.mxu0 0.0
        %681 = vmatmul.mubr.f32.gmra.mrb[0].mxu0 %v583
        %v682 = vpop.f32.mrb[0].mxu0
        %v683 = vadd.f32 %v554, %v682
        %v684 = vpop.f32.mrb[0].mxu0
        %685 = vmatprep.mubr.f32.mxu0 0.0
        %686 = vmatmul.mubr.f32.gmra.mrb[0].mxu0 %v586
        %v687 = vpop.f32.mrb[0].mxu0
        %v688 = vadd.f32 %v559, %v687
        %v689 = vpop.f32.mrb[0].mxu0
        %690 = vmatprep.mubr.f32.mxu0 0.0
        %691 = vmatmul.mubr.f32.gmra.mrb[0].mxu0 %v589
        %v692 = vpop.f32.mrb[0].mxu0
        %v693 = vadd.f32 %v564, %v692
        %v694 = vpop.f32.mrb[0].mxu0
        %695 = vdwg.mxu0
        %v696 = vld [vmem:[%s3] sm:$0x1]
        %v698 = vlaneseq
        %v699 = vshrl.u32 %v698, 7
        %v700 = vsub.s32 0, %v699
        %v701 = vrot.slane %v696, %v700
        %v703 = vadd.f32 %v658, %v701
        %v704 = vadd.f32 %v663, %v701
        %v705 = vadd.f32 %v668, %v701
        %v706 = vadd.f32 %v673, %v701
        %v707 = vadd.f32 %v678, %v701
        %v708 = vadd.f32 %v683, %v701
        %v709 = vadd.f32 %v688, %v701
        %v710 = vadd.f32 %v693, %v701
        %711 = vst.msk [vmem:[%s193] sm:$0xff] %vm219, %v703
        %712 = vst.msk [vmem:[%s193 + $0x8] sm:$0xff] %vm219, %v704
        %713 = vst.msk [vmem:[%s193 + $0x10] sm:$0xff] %vm219, %v705
        %714 = vst.msk [vmem:[%s193 + $0x18] sm:$0xff] %vm219, %v706
        %715 = vst.msk [vmem:[%s193 + $0x20] sm:$0xff] %vm219, %v707
        %716 = vst.msk [vmem:[%s193 + $0x28] sm:$0xff] %vm219, %v708
        %717 = vst.msk [vmem:[%s193 + $0x30] sm:$0xff] %vm219, %v709
        %718 = vst.msk [vmem:[%s193 + $0x38] sm:$0xff] %vm219, %v710
        %s719 = sand.u32 %s115, 1
        %s720 = scalar_lea.sflag [#allocation3], %s719
        %s721 = sand.u32 %s115, 1
        %s722 = smul.addr %s721, 64
        %s723 = scalar_lea.vmem [#allocation2], %s722
        // Predicated region
        $region37: #{patch_merging_2d.1} parent=35 // pred_check
          %p724 = pneg %p125
        $region38: #{patch_merging_2d.1} parent=35 // pred_check_branch
          %726 = sbr.rel (%p724) target = $region40
        $region39: #{patch_merging_2d.1} parent=35 // pred_region
          %s727 = smul.u32 8, %s18
          %s729 = ssub.s32 1024, 1024
          %730 = vsyncadd %s720, %s729
          %s731 = smul.addr %s727, 128
          %s732 = scalar_lea.hbm %s4, %s731
          %s733 = sshll.u32 %s723, 4
          %s734 = int_to_ptr.vmem [resolvable:$true] %s733
          %739 = dma.vmem_to_hbm [thread:$0]  %s734, 1024, %s732, %s720, 128, 128, 8
        $region40: #{patch_merging_2d.1} parent=35 // pred_fallthru
          _
      $region36: #{patch_merging_2d.1} parent=5 // pred_fallthru
        _
      %p740 = scmp.le.s32.totalorder 2, %s13
      // Predicated region
      $region41: #{patch_merging_2d.1} parent=5 // pred_check
        %p741 = pneg %p740
      $region42: #{patch_merging_2d.1} parent=5 // pred_check_branch
        %743 = sbr.rel (%p741) target = $region44
      $region43: #{patch_merging_2d.1} parent=5 // pred_region
        %s744 = ssub.s32 %s13, 2
        // Predicated region
        $region45: #{patch_merging_2d.1} parent=43 // pred_check
          %p745 = pneg %p131
        $region46: #{patch_merging_2d.1} parent=43 // pred_check_branch
          %747 = sbr.rel (%p745) target = $region48
        $region47: #{patch_merging_2d.1} parent=43 // pred_region
          %s748 = sand.u32 %s116, 1
          %s749 = scalar_lea.sflag [#allocation3], %s748
          %s750 = sand.u32 %s116, 1
          %s751 = smul.addr %s750, 64
          %s752 = scalar_lea.vmem [#allocation2], %s751
          %753 = dma.done %s749, 1024
        $region48: #{patch_merging_2d.1} parent=43 // pred_fallthru
          _
      $region44: #{patch_merging_2d.1} parent=5 // pred_fallthru
        _
    $region6: #{patch_merging_2d.1} parent=1 // loop_footer
      %s17 = sadd.s32 1, %s13
    $region7: #{patch_merging_2d.1} parent=1 // loop_footer_branch
      %12 = sbr.rel target = $region3
    $region8: #{patch_merging_2d.1} parent=1 // loop_exit
      _
    %754 = vsyncpa [#allocation3], 1
    %s755 = scalar_lea.sflag [#allocation3], 1
    %756 = vsyncpa %s755, 1

</llo_original>
